<compile_context>
chip_gen: v7x
topology: tpu7x:2x2x1
jax: 0.10.0
libtpu: 0.0.40
codegen_flags: <defaults>
</compile_context>

<pallas_src>
import jax
import jax.numpy as jnp
from jax.experimental import pallas as pl
from jax.experimental.pallas import tpu as pltpu

LANES = 128
SUBLANES = 8


def _round_up(a, b):
    return ((a + b - 1) // b) * b


def _cdiv(a, b):
    return -(-a // b)


def _vmem_capacity_bytes():
    try:
        return int(pltpu.get_tpu_info().vmem_capacity_bytes)
    except Exception:
        return 64 * 1024 * 1024  # most conservative per-TensorCore VMEM (v7x)


def _default_num_parallel():
    # Two grid slices only pay off when the device has 2 TensorCores (v7x);
    # on single-TC chips (v5e/v6e) the "parallel" axis is just a serial loop.
    try:
        kind = jax.devices()[0].device_kind.lower()
    except Exception:
        return 1
    return 2 if "7" in kind else 1


def _make_kernel(tile_rows, k_steps, first_masked_block, total_blocks, m):
    """Build the kernel with all shape/grid constants closed over statically."""
    needs_mask = total_blocks > first_masked_block
    groups = tile_rows // SUBLANES

    def kernel(x_ref, t_ref, w_ref, out_ref):
        pi = pl.program_id(0)
        ki = pl.program_id(1)

        @pl.when(ki == 0)
        def _init():
            out_ref[...] = jnp.zeros_like(out_ref)

        x = x_ref[...].astype(jnp.float32)
        t = t_ref[...].astype(jnp.float32)
        w = w_ref[...].astype(jnp.float32)

        # Numerically stable binary_cross_entropy_with_logits, reduction='none'
        loss = jnp.maximum(x, 0.0) - x * t + jnp.log1p(jnp.exp(-jnp.abs(x)))
        prod = loss * w

        def accumulate(v):
            # (tile,128) -> (groups,8,128) is a pure sublane-group split (no
            # relayout); the axis-0 sum is plain elementwise vreg adds into the
            # resident (8,128) f32 output block.
            out_ref[...] += v.reshape(groups, SUBLANES, LANES).sum(axis=0)

        if not needs_mask:
            accumulate(prod)
        else:
            # Logical (unclamped) block index: used for the validity mask so
            # clamped overshoot blocks contribute exactly zero.
            blk = pi * k_steps + ki

            @pl.when(blk < first_masked_block)
            def _full_block():
                accumulate(prod)

            @pl.when(blk >= first_masked_block)
            def _boundary_block():
                row = jax.lax.broadcasted_iota(jnp.int32, (tile_rows, LANES), 0)
                lane = jax.lax.broadcasted_iota(jnp.int32, (tile_rows, LANES), 1)
                flat = (blk * tile_rows + row) * LANES + lane
                accumulate(jnp.where(flat < m, prod, 0.0))

    return kernel


def bce_weighted_multi_task(inputs, targets, weights, *, tile_rows=2048,
                            num_parallel=None):
    """Weighted multi-task BCE-with-logits loss (scalar mean), any shape."""
    assert inputs.shape == targets.shape == weights.shape
    m = int(inputs.size)
    assert 0 < m < 2 ** 31  # int32 flat indexing inside the kernel

    x = inputs.reshape(-1)
    t = targets.reshape(-1)
    w = weights.reshape(-1)

    n_data_rows = _cdiv(m, LANES)  # 128-lane rows that contain data

    # Only a lane-ragged total needs a host-side pad (<128 elements, but XLA
    # copies the arrays). Lane-aligned totals — the common large-tensor case —
    # take the zero-copy path; row raggedness is masked inside the kernel.
    if m % LANES != 0:
        pad = n_data_rows * LANES - m
        x = jnp.pad(x, (0, pad))
        t = jnp.pad(t, (0, pad))
        w = jnp.pad(w, (0, pad))  # zero weight => pad contributes exactly 0
    rows_arr = n_data_rows

    x = x.reshape(rows_arr, LANES)
    t = t.reshape(rows_arr, LANES)
    w = w.reshape(rows_arr, LANES)

    # Dtype-native sublane granularity: bf16 packs 2 rows/sublane, 8-bit packs 4.
    min_itemsize = min(jnp.dtype(a.dtype).itemsize for a in (x, t, w))
    sub_mult = SUBLANES * max(1, 4 // max(1, min_itemsize))

    tile_eff = min(max(int(tile_rows), sub_mult), _round_up(rows_arr, sub_mult))
    tile_eff = _round_up(tile_eff, sub_mult)

    n_blocks = _cdiv(rows_arr, tile_eff)  # blocks that contain data
    if num_parallel is None:
        num_parallel = _default_num_parallel()
    p = max(1, min(int(num_parallel), n_blocks))  # megacore slices
    k_steps = _cdiv(n_blocks, p)                  # reduction steps per slice
    total_blocks = p * k_steps

    tile_elems = tile_eff * LANES
    first_masked_block = m // tile_elems  # first block containing invalid elems

    kernel = _make_kernel(tile_eff, k_steps, first_masked_block, total_blocks, m)

    def in_map(pi, ki):
        # Clamp so fully-empty overshoot blocks re-read the last data block;
        # their contribution is masked to zero inside the kernel.
        return (jnp.minimum(pi * k_steps + ki, n_blocks - 1), 0)

    in_spec = pl.BlockSpec((tile_eff, LANES), in_map)
    out_spec = pl.BlockSpec((SUBLANES, LANES), lambda pi, ki: (pi, 0))

    # VMEM budget: 2 pipeline buffers per input (each with its own dtype) plus
    # the resident (8,128) f32 output block. Only override the scoped limit
    # when it could actually be tight, and clamp to physical VMEM.
    per_row_bytes = sum(jnp.dtype(a.dtype).itemsize for a in (x, t, w)) * LANES
    needed = 2 * tile_eff * per_row_bytes + 2 * SUBLANES * LANES * 4
    vmem_limit = None
    if needed > 8 * 1024 * 1024:
        cap = _vmem_capacity_bytes()
        vmem_limit = min(needed + (6 << 20), max(needed, cap - (16 << 20)))

    partial = pl.pallas_call(
        kernel,
        out_shape=jax.ShapeDtypeStruct((p * SUBLANES, LANES), jnp.float32),
        grid_spec=pltpu.PrefetchScalarGridSpec(
            num_scalar_prefetch=0,
            grid=(p, k_steps),
            in_specs=[in_spec, in_spec, in_spec],
            out_specs=out_spec,
        ),
        compiler_params=pltpu.CompilerParams(
            dimension_semantics=("parallel", "arbitrary"),
            vmem_limit_bytes=vmem_limit,
        ),
    )(x, t, w)

    # Tiny final reduce (p*8*128 elements) + mean normalization in XLA.
    return jnp.sum(partial) * jnp.float32(1.0 / m)


def _reference(inputs, targets, weights):
    xf = inputs.astype(jnp.float32)
    tf = targets.astype(jnp.float32)
    wf = weights.astype(jnp.float32)
    loss = jnp.maximum(xf, 0.0) - xf * tf + jnp.log1p(jnp.exp(-jnp.abs(xf)))
    return jnp.mean(loss * wf)


if __name__ == "__main__":
    key = jax.random.PRNGKey(0)

    # 1) Small multi-task shape with a lane-ragged total (pad + mask path).
    k1, k2, k3, key = jax.random.split(key, 4)
    a = jax.random.normal(k1, (2, 37), dtype=jnp.float32) * 2.0
    b = (jax.random.uniform(k2, (2, 37)) > 0.5).astype(jnp.float32)
    c = jax.random.uniform(k3, (2, 37), dtype=jnp.float32) + 0.5
    out = jax.block_until_ready(bce_weighted_multi_task(a, b, c))
    ref = jax.block_until_ready(_reference(a, b, c))
    assert jnp.allclose(out, ref, rtol=1e-5, atol=1e-6), (out, ref)

    # 2) Lane-aligned but row-ragged (zero-copy path, in-kernel masked tail),
    #    small tile so both grid axes have multiple steps.
    k4, k5, k6, key = jax.random.split(key, 4)
    a = jax.random.normal(k4, (100, 128), dtype=jnp.float32) * 2.0
    b = (jax.random.uniform(k5, (100, 128)) > 0.5).astype(jnp.float32)
    c = jax.random.uniform(k6, (100, 128), dtype=jnp.float32) + 0.5
    out = jax.block_until_ready(
        bce_weighted_multi_task(a, b, c, tile_rows=16, num_parallel=2))
    ref = jax.block_until_ready(_reference(a, b, c))
    assert jnp.allclose(out, ref, rtol=1e-5, atol=1e-6), (out, ref)

    # 3) Fully tile-aligned (no pad, no mask), multi-step reduction + 2 slices.
    k7, k8, k9, key = jax.random.split(key, 4)
    a = jax.random.normal(k7, (256, 128), dtype=jnp.float32) * 2.0
    b = (jax.random.uniform(k8, (256, 128)) > 0.5).astype(jnp.float32)
    c = jax.random.uniform(k9, (256, 128), dtype=jnp.float32) + 0.5
    out = jax.block_until_ready(
        bce_weighted_multi_task(a, b, c, tile_rows=64, num_parallel=2))
    ref = jax.block_until_ready(_reference(a, b, c))
    assert jnp.allclose(out, ref, rtol=1e-5, atol=1e-6), (out, ref)

    # 4) bf16 inputs: 16-row sublane granularity, in-kernel f32 accumulation.
    kA, kB, kC, key = jax.random.split(key, 4)
    a = (jax.random.normal(kA, (48, 128), dtype=jnp.float32) * 2.0).astype(jnp.bfloat16)
    b = (jax.random.uniform(kB, (48, 128)) > 0.5).astype(jnp.bfloat16)
    c = (jax.random.uniform(kC, (48, 128), dtype=jnp.float32) + 0.5).astype(jnp.bfloat16)
    out = jax.block_until_ready(bce_weighted_multi_task(a, b, c, tile_rows=16))
    ref = jax.block_until_ready(_reference(a, b, c))
    assert jnp.allclose(out, ref, rtol=1e-4, atol=1e-5), (out, ref)

    print("KERNEL_OK")
</pallas_src>

<mosaic_0001>
module attributes {stable_mosaic.version = 11 : i64} {
  func.func @kernel(%arg0: i32, %arg1: i32, %arg2: memref<8x128xf32, #tpu.memory_space<vmem>>, %arg3: memref<8x128xf32, #tpu.memory_space<vmem>>, %arg4: memref<8x128xf32, #tpu.memory_space<vmem>>, %arg5: memref<8x128xf32, #tpu.memory_space<vmem>>) attributes {dimension_semantics = [#tpu.dimension_semantics<parallel>, #tpu.dimension_semantics<arbitrary>], iteration_bounds = array<i64: 1, 1>, scalar_prefetch = 0 : i64, scratch_operands = 0 : i64, tpu.core_type = #tpu.core_type<tc>, window_params = [{transform_indices = @transform_0, window_bounds = array<i64: 8, 128>}, {transform_indices = @transform_1, window_bounds = array<i64: 8, 128>}, {transform_indices = @transform_2, window_bounds = array<i64: 8, 128>}, {transform_indices = @transform_3, window_bounds = array<i64: 8, 128>}]} {
    %c0_i32 = arith.constant 0 : i32
    %0 = arith.cmpi eq, %arg1, %c0_i32 : i32
    %1 = arith.extui %0 : i1 to i32
    %c0_i32_0 = arith.constant 0 : i32
    %2 = arith.cmpi ne, %1, %c0_i32_0 : i32
    scf.if %2 {
      %cst_11 = arith.constant 0.000000e+00 : f32
      %25 = vector.broadcast %cst_11 : f32 to vector<8x128xf32>
      %c0_12 = arith.constant 0 : index
      %c0_13 = arith.constant 0 : index
      %26 = vector.load %arg5[%c0_12, %c0_13] : memref<8x128xf32, #tpu.memory_space<vmem>>, vector<8x128xf32>
      tpu.vector_store %arg5[%c0_12, %c0_13], %25 {strides = array<i32>} : memref<8x128xf32, #tpu.memory_space<vmem>>, vector<8x128xf32>,
    } else {
    }
    %c0 = arith.constant 0 : index
    %c0_1 = arith.constant 0 : index
    %3 = vector.load %arg2[%c0, %c0_1] : memref<8x128xf32, #tpu.memory_space<vmem>>, vector<8x128xf32>
    %c0_2 = arith.constant 0 : index
    %c0_3 = arith.constant 0 : index
    %4 = vector.load %arg3[%c0_2, %c0_3] : memref<8x128xf32, #tpu.memory_space<vmem>>, vector<8x128xf32>
    %c0_4 = arith.constant 0 : index
    %c0_5 = arith.constant 0 : index
    %5 = vector.load %arg4[%c0_4, %c0_5] : memref<8x128xf32, #tpu.memory_space<vmem>>, vector<8x128xf32>
    %cst = arith.constant 0.000000e+00 : f32
    %6 = vector.broadcast %cst : f32 to vector<8x128xf32>
    %7 = arith.maximumf %3, %6 : vector<8x128xf32>
    %8 = arith.mulf %3, %4 : vector<8x128xf32>
    %9 = arith.subf %7, %8 : vector<8x128xf32>
    %10 = math.absf %3 : vector<8x128xf32>
    %cst_6 = arith.constant 0.000000e+00 : f32
    %11 = vector.broadcast %cst_6 : f32 to vector<8x128xf32>
    %12 = arith.subf %11, %10 : vector<8x128xf32>
    %13 = math.exp %12 : vector<8x128xf32>
    %14 = math.log1p %13 : vector<8x128xf32>
    %15 = arith.addf %9, %14 : vector<8x128xf32>
    %16 = arith.mulf %15, %5 : vector<8x128xf32>
    %c1_i32 = arith.constant 1 : i32
    %17 = arith.muli %arg0, %c1_i32 : i32
    %18 = arith.addi %17, %arg1 : i32
    %c0_i32_7 = arith.constant 0 : i32
    %19 = arith.cmpi slt, %18, %c0_i32_7 : i32
    %20 = arith.extui %19 : i1 to i32
    %c0_i32_8 = arith.constant 0 : i32
    %21 = arith.cmpi ne, %20, %c0_i32_8 : i32
    scf.if %21 {
      %c0_11 = arith.constant 0 : index
      %c0_12 = arith.constant 0 : index
      %25 = vector.load %arg5[%c0_11, %c0_12] : memref<8x128xf32, #tpu.memory_space<vmem>>, vector<8x128xf32>
      %26 = vector.shape_cast %16 : vector<8x128xf32> to vector<1x8x128xf32>
      %cst_13 = arith.constant dense<0.000000e+00> : vector<8x128xf32>
      %27 = vector.multi_reduction <add>, %26, %cst_13 [0] : vector<1x8x128xf32> to vector<8x128xf32>
      %28 = arith.addf %25, %27 : vector<8x128xf32>
      %c0_14 = arith.constant 0 : index
      %c0_15 = arith.constant 0 : index
      %29 = vector.load %arg5[%c0_14, %c0_15] : memref<8x128xf32, #tpu.memory_space<vmem>>, vector<8x128xf32>
      tpu.vector_store %arg5[%c0_14, %c0_15], %28 {strides = array<i32>} : memref<8x128xf32, #tpu.memory_space<vmem>>, vector<8x128xf32>,
    } else {
    }
    %c0_i32_9 = arith.constant 0 : i32
    %22 = arith.cmpi sge, %18, %c0_i32_9 : i32
    %23 = arith.extui %22 : i1 to i32
    %c0_i32_10 = arith.constant 0 : i32
    %24 = arith.cmpi ne, %23, %c0_i32_10 : i32
    scf.if %24 {
      %25 = tpu.iota {dimensions = array<i32: 0>} : vector<8x128xi32>
      %26 = tpu.iota {dimensions = array<i32: 1>} : vector<8x128xi32>
      %c8_i32 = arith.constant 8 : i32
      %27 = arith.muli %18, %c8_i32 : i32
      %28 = vector.broadcast %27 : i32 to vector<8x128xi32>
      %29 = arith.addi %28, %25 : vector<8x128xi32>
      %c128_i32 = arith.constant 128 : i32
      %30 = vector.broadcast %c128_i32 : i32 to vector<8x128xi32>
      %31 = arith.muli %29, %30 : vector<8x128xi32>
      %32 = arith.addi %31, %26 : vector<8x128xi32>
      %c74_i32 = arith.constant 74 : i32
      %33 = vector.broadcast %c74_i32 : i32 to vector<8x128xi32>
      %34 = arith.cmpi slt, %32, %33 : vector<8x128xi32>
      %cst_11 = arith.constant 0.000000e+00 : f32
      %35 = vector.broadcast %cst_11 : f32 to vector<8x128xf32>
      %36 = arith.select %34, %16, %35 : vector<8x128xi1>, vector<8x128xf32>
      %c0_12 = arith.constant 0 : index
      %c0_13 = arith.constant 0 : index
      %37 = vector.load %arg5[%c0_12, %c0_13] : memref<8x128xf32, #tpu.memory_space<vmem>>, vector<8x128xf32>
      %38 = vector.shape_cast %36 : vector<8x128xf32> to vector<1x8x128xf32>
      %cst_14 = arith.constant dense<0.000000e+00> : vector<8x128xf32>
      %39 = vector.multi_reduction <add>, %38, %cst_14 [0] : vector<1x8x128xf32> to vector<8x128xf32>
      %40 = arith.addf %37, %39 : vector<8x128xf32>
      %c0_15 = arith.constant 0 : index
      %c0_16 = arith.constant 0 : index
      %41 = vector.load %arg5[%c0_15, %c0_16] : memref<8x128xf32, #tpu.memory_space<vmem>>, vector<8x128xf32>
      tpu.vector_store %arg5[%c0_15, %c0_16], %40 {strides = array<i32>} : memref<8x128xf32, #tpu.memory_space<vmem>>, vector<8x128xf32>,
    } else {
    }
    return
  }
  func.func @transform_0(%arg0: i32, %arg1: i32) -> (i32, i32) {
    %c1_i32 = arith.constant 1 : i32
    %0 = arith.muli %arg0, %c1_i32 : i32
    %1 = arith.addi %0, %arg1 : i32
    %c0_i32 = arith.constant 0 : i32
    %2 = arith.minsi %1, %c0_i32 : i32
    %c0_i32_0 = arith.constant 0 : i32
    %c0_i32_1 = arith.constant 0 : i32
    return %2, %c0_i32_0 : i32, i32
  }
  func.func @transform_1(%arg0: i32, %arg1: i32) -> (i32, i32) {
    %c1_i32 = arith.constant 1 : i32
    %0 = arith.muli %arg0, %c1_i32 : i32
    %1 = arith.addi %0, %arg1 : i32
    %c0_i32 = arith.constant 0 : i32
    %2 = arith.minsi %1, %c0_i32 : i32
    %c0_i32_0 = arith.constant 0 : i32
    %c0_i32_1 = arith.constant 0 : i32
    return %2, %c0_i32_0 : i32, i32
  }
  func.func @transform_2(%arg0: i32, %arg1: i32) -> (i32, i32) {
    %c1_i32 = arith.constant 1 : i32
    %0 = arith.muli %arg0, %c1_i32 : i32
    %1 = arith.addi %0, %arg1 : i32
    %c0_i32 = arith.constant 0 : i32
    %2 = arith.minsi %1, %c0_i32 : i32
    %c0_i32_0 = arith.constant 0 : i32
    %c0_i32_1 = arith.constant 0 : i32
    return %2, %c0_i32_0 : i32, i32
  }
  func.func @transform_3(%arg0: i32, %arg1: i32) -> (i32, i32) {
    %c0_i32 = arith.constant 0 : i32
    %c0_i32_0 = arith.constant 0 : i32
    return %arg0, %c0_i32 : i32, i32
  }
}

</mosaic_0001>

<llo_original>
// kernel: tpu_custom_call.1
$region0: #{tpu_custom_call.1}
  #allocation0 [shape = 'u32[]', space=smem, size = 0x4, offset = 0x4, fixed_abs, tag = 'smem constant byte address 0x4 - core index']
  #allocation1 [shape = 'u32[144,128]{1,0:T(1,128)}', space=vmem, size = 0x12000, scoped, tag = 'internal scratch']
  %s0 = inlined_call_operand.hbm [shape: f32[1,128], index: 0, kind: input, shape index: {}]
  %s1 = inlined_call_operand.vmem [shape: f32[1,128], index: 1, kind: input, shape index: {}]
  %s2 = inlined_call_operand.vmem [shape: f32[1,128], index: 2, kind: input, shape index: {}]
  %s3 = inlined_call_operand.hbm [shape: f32[8,128], index: 3, kind: output, shape index: {}]
  %s4 = sld [smem:[#allocation0]]
  $region38: #{tpu_custom_call.1} parent=0
    _
  %s6 = ssub.s32 1, %s4
  %s7 = scalar_select 0, %s6, %s4
  $region1: #{tpu_custom_call.1} parent=0
    #allocation2 [shape = 'u8[4096]{0}', space=vmem, size = 0x1000, scoped, tag = 'input window, operand 0, single buffered']
    #allocation3 [shape = 's32[1]{0}', space=sflag, size = 0x4, scoped, tag = 'scoped memory for tpu_custom_call.1']
    #allocation4 [shape = 's32[1]{0}', space=sflag, size = 0x4, scoped, tag = 'scoped memory for tpu_custom_call.1']
    #allocation5 [shape = 'u8[4096]{0}', space=vmem, size = 0x1000, scoped, tag = 'output window, operand 0, single buffered']
    %8 = vsyncpa [#allocation3], 0
    %9 = vsyncpa [#allocation4], 0
    // Predicated region
    $region2: #{tpu_custom_call.1} parent=1 // pred_check
      _
    $region3: #{tpu_custom_call.1} parent=1 // pred_check_branch
      %11 = sbr.rel (0) target = $region5
    $region4: #{tpu_custom_call.1} parent=1 // pred_region
      %s12 = sadd.s32 0, 0
      %p13 = scmp.lt.s32.totalorder %s12, 0
      %s14 = scalar_select %p13, %s12, 0
      %s15 = smul.u32 8, %s14
      %s16 = ssub.s32 1, %s15
      %s17 = smul.u32 16, %s16
      %s19 = ssub.s32 128, %s17
      %20 = vsyncadd [#allocation3], %s19
      %p21 = scmp.ne.s32.totalorder 0, %s17
      %s22 = smul.addr %s15, 16
      %s23 = scalar_lea.hbm %s0, %s22
      %s24 = sshll.u32 [#allocation2], 4
      %s25 = int_to_ptr.vmem [resolvable:$true] %s24
      %s26 = sshll.u32 %s16, 4
      %30 = dma.hbm_to_vmem [thread:$0]  (%p21), %s23, %s26, %s25, [#allocation3], 16, 16, 1
    $region5: #{tpu_custom_call.1} parent=1 // pred_fallthru
      _
    // Predicated region
    $region6: #{tpu_custom_call.1} parent=1 // pred_check
      _
    $region7: #{tpu_custom_call.1} parent=1 // pred_check_branch
      %32 = sbr.rel (0) target = $region9
    $region8: #{tpu_custom_call.1} parent=1 // pred_region
      %s33 = sadd.s32 0, 0
      %p34 = scmp.lt.s32.totalorder %s33, 0
      %s35 = scalar_select %p34, %s33, 0
      %s36 = smul.u32 8, %s35
      %s37 = ssub.s32 1, %s36
      %s38 = smul.u32 16, %s37
      %p39 = scmp.lt.s32.totalorder %s36, 0
      %s40 = scalar_select %p39, %s36, 0
      %s41 = scalar_lea.vmem %s1, %s40
      %s42 = sadd.s32 0, 0
      %p43 = scmp.lt.s32.totalorder %s42, 0
      %s44 = scalar_select %p43, %s42, 0
      %s45 = smul.u32 8, %s44
      %s46 = ssub.s32 1, %s45
      %s47 = smul.u32 16, %s46
    $region9: #{tpu_custom_call.1} parent=1 // pred_fallthru
      _
    // Predicated region
    $region10: #{tpu_custom_call.1} parent=1 // pred_check
      _
    $region11: #{tpu_custom_call.1} parent=1 // pred_check_branch
      %49 = sbr.rel (0) target = $region13
    $region12: #{tpu_custom_call.1} parent=1 // pred_region
      %s50 = sadd.s32 0, 0
      %p51 = scmp.lt.s32.totalorder %s50, 0
      %s52 = scalar_select %p51, %s50, 0
      %s53 = smul.u32 8, %s52
      %s54 = ssub.s32 1, %s53
      %s55 = smul.u32 16, %s54
      %p56 = scmp.lt.s32.totalorder %s53, 0
      %s57 = scalar_select %p56, %s53, 0
      %s58 = scalar_lea.vmem %s2, %s57
      %s59 = sadd.s32 0, 0
      %p60 = scmp.lt.s32.totalorder %s59, 0
      %s61 = scalar_select %p60, %s59, 0
      %s62 = smul.u32 8, %s61
      %s63 = ssub.s32 1, %s62
      %s64 = smul.u32 16, %s63
    $region13: #{tpu_custom_call.1} parent=1 // pred_fallthru
      _
    // Predicated region
    $region14: #{tpu_custom_call.1} parent=1 // pred_check
      _
    $region15: #{tpu_custom_call.1} parent=1 // pred_check_branch
      %66 = sbr.rel (0) target = $region17
    $region16: #{tpu_custom_call.1} parent=1 // pred_region
      %67 = dma.done [#allocation3], 128
    $region17: #{tpu_custom_call.1} parent=1 // pred_fallthru
      _
    %s68 = sadd.s32 0, 0
    %p69 = scmp.lt.s32.totalorder %s68, 0
    %s70 = scalar_select %p69, %s68, 0
    %s71 = smul.u32 8, %s70
    %s72 = ssub.s32 1, %s71
    %s73 = smul.u32 16, %s72
    %p74 = scmp.lt.s32.totalorder %s71, 0
    %s75 = scalar_select %p74, %s71, 0
    %s76 = scalar_lea.vmem %s1, %s75
    %s77 = sadd.s32 0, 0
    %p78 = scmp.lt.s32.totalorder %s77, 0
    %s79 = scalar_select %p78, %s77, 0
    %s80 = smul.u32 8, %s79
    %s81 = ssub.s32 1, %s80
    %s82 = smul.u32 16, %s81
    %p83 = scmp.lt.s32.totalorder %s80, 0
    %s84 = scalar_select %p83, %s80, 0
    %s85 = scalar_lea.vmem %s2, %s84
    %s86 = sadd.s32 0, 0
    %p87 = scmp.lt.s32.totalorder %s86, 0
    %s88 = scalar_select %p87, %s86, 0
    %s89 = smul.u32 8, %s88
    %s90 = ssub.s32 1, %s89
    %s91 = smul.u32 16, %s90
    %s92 = sadd.s32 0, 0
    %p93 = scmp.lt.s32.totalorder %s92, 0
    %s94 = scalar_select %p93, %s92, 0
    %s95 = smul.u32 8, %s94
    %s96 = ssub.s32 1, %s95
    %s97 = smul.u32 16, %s96
    %p98 = scmp.lt.s32.totalorder %s95, 0
    %s99 = scalar_select %p98, %s95, 0
    %s100 = scalar_lea.vmem %s1, %s99
    %s101 = sadd.s32 0, 0
    %p102 = scmp.lt.s32.totalorder %s101, 0
    %s103 = scalar_select %p102, %s101, 0
    %s104 = smul.u32 8, %s103
    %s105 = ssub.s32 1, %s104
    %s106 = smul.u32 16, %s105
    %s107 = sadd.s32 0, 0
    %p108 = scmp.lt.s32.totalorder %s107, 0
    %s109 = scalar_select %p108, %s107, 0
    %s110 = smul.u32 8, %s109
    %s111 = ssub.s32 1, %s110
    %s112 = smul.u32 16, %s111
    %p113 = scmp.lt.s32.totalorder %s110, 0
    %s114 = scalar_select %p113, %s110, 0
    %s115 = scalar_lea.vmem %s2, %s114
    %s116 = sadd.s32 0, 0
    %p117 = scmp.lt.s32.totalorder %s116, 0
    %s118 = scalar_select %p117, %s116, 0
    %s119 = smul.u32 8, %s118
    %s120 = ssub.s32 1, %s119
    %s121 = smul.u32 16, %s120
    %p122 = scmp.eq.s32.totalorder 0, 0
    // Predicated region
    $region18: #{tpu_custom_call.1} parent=1 // pred_check
      %p123 = pneg %p122
    $region19: #{tpu_custom_call.1} parent=1 // pred_check_branch
      %125 = sbr.rel (%p123) target = $region21
    $region20: #{tpu_custom_call.1} parent=1 // pred_region
      %126 = vst [vmem:[#allocation5] sm:$0xff] 0.0
    $region21: #{tpu_custom_call.1} parent=1 // pred_fallthru
      _
    %v127 = vld [vmem:[#allocation2] sm:$0xff]
    %v128 = vld [vmem:[%s100] sm:$0xff]
    %v129 = vld [vmem:[%s115] sm:$0xff]
    %v130 = vmax.f32 %v127, 0.0
    %v131 = vmul.f32 %v127, %v128
    %v132 = vsub.f32 %v130, %v131
    %v133 = vand.u32 2147483647, %v127
    %v134 = vsub.f32 0.0, %v133
    %v135 = vmul.f32 %v134, 1.442695
    %v136 = vpow.pop %v135
    %v137 = vadd.f32 %v136, 1.0
    %v138 = vlog2.pop %v137
    %v139 = vmul.f32 %v138, 0.6931472
    %v140 = vmul.f32 -0.5, %v136
    %v141 = vadd.f32 %v140, 1.0
    %v142 = vmul.f32 %v141, %v136
    %v143 = vand.u32 2147483647, %v136
    %vm144 = vcmp.lt.f32.partialorder %v143, 0.0004427343
    %v145 = vsel %vm144, %v142, %v139
    %v146 = vadd.f32 %v132, %v145
    %v147 = vmul.f32 %v146, %v129
    %s148 = sadd.s32 0, 0
    %p149 = scmp.lt.s32.totalorder %s148, 0
    // Predicated region
    $region22: #{tpu_custom_call.1} parent=1 // pred_check
      %p150 = pneg %p149
    $region23: #{tpu_custom_call.1} parent=1 // pred_check_branch
      %152 = sbr.rel (%p150) target = $region25
    $region24: #{tpu_custom_call.1} parent=1 // pred_region
      %v153 = vld [vmem:[#allocation5] sm:$0xff]
      %v154 = vadd.f32 %v147, 0.0
      %v155 = vadd.f32 %v153, %v154
      %156 = vst [vmem:[#allocation5] sm:$0xff] %v155
    $region25: #{tpu_custom_call.1} parent=1 // pred_fallthru
      _
    %p157 = scmp.ge.s32.totalorder %s148, 0
    // Predicated region
    $region26: #{tpu_custom_call.1} parent=1 // pred_check
      %p158 = pneg %p157
    $region27: #{tpu_custom_call.1} parent=1 // pred_check_branch
      %160 = sbr.rel (%p158) target = $region29
    $region28: #{tpu_custom_call.1} parent=1 // pred_region
      %v161 = vlaneseq
      %v162 = vshrl.u32 %v161, 7
      %v163 = vlaneseq
      %v164 = vand.u32 %v163, 127
      %s165 = smul.u32 %s148, 8
      %v166 = vstv %s165
      %v167 = vadd.s32 %v166, %v162
      %v168 = vmul.u32 %v167, 128
      %v169 = vadd.s32 %v168, %v164
      %vm170 = vcmp.lt.s32.totalorder %v169, 74
      %v171 = vsel %vm170, %v147, 0.0
      %v172 = vld [vmem:[#allocation5] sm:$0xff]
      %v173 = vadd.f32 %v171, 0.0
      %v174 = vadd.f32 %v172, %v173
      %175 = vst [vmem:[#allocation5] sm:$0xff] %v174
    $region29: #{tpu_custom_call.1} parent=1 // pred_fallthru
      _
    // Predicated region
    $region30: #{tpu_custom_call.1} parent=1 // pred_check
      _
    $region31: #{tpu_custom_call.1} parent=1 // pred_check_branch
      %177 = sbr.rel (0) target = $region33
    $region32: #{tpu_custom_call.1} parent=1 // pred_region
      %s179 = ssub.s32 128, 128
      %180 = vsyncadd [#allocation4], %s179
      %s182 = sshll.u32 [#allocation5], 4
      %s183 = int_to_ptr.vmem [resolvable:$true] %s182
      %185 = dma.vmem_to_hbm [thread:$0]  %s183, 128, %s3, [#allocation4]
    $region33: #{tpu_custom_call.1} parent=1 // pred_fallthru
      _
    // Predicated region
    $region34: #{tpu_custom_call.1} parent=1 // pred_check
      _
    $region35: #{tpu_custom_call.1} parent=1 // pred_check_branch
      %187 = sbr.rel (0) target = $region37
    $region36: #{tpu_custom_call.1} parent=1 // pred_region
      %188 = dma.done [#allocation4], 128
    $region37: #{tpu_custom_call.1} parent=1 // pred_fallthru
      _
    %189 = vsyncpa [#allocation3], 1
    %190 = vsyncpa [#allocation4], 1

</llo_original>
